<compile_context>
chip_gen: v7x
topology: tpu7x:2x2x1
jax: 0.10.0
libtpu: 0.0.40
codegen_flags: <defaults>
</compile_context>

<pallas_src>
import jax
import jax.numpy as jnp
from jax.experimental import pallas as pl
from jax.experimental.pallas import tpu as pltpu

_LANES = 128
_SUBLANES = 8


def _squeeze_sun(x):
    # PyTorch `.squeeze()` on (N, S, 1) -> (N, S).  Only drop the trailing
    # singleton so a hypothetical N == 1 batch does not lose its ray axis.
    return x[..., 0] if (x.ndim >= 2 and x.shape[-1] == 1) else x


def _to_lane_major(x):
    """Flatten, zero-pad, reshape to a lane-dense (rows, 128) slab, rows % 8 == 0."""
    flat = x.reshape(-1)
    n = flat.shape[0]
    chunk = _LANES * _SUBLANES
    n_pad = (-n) % chunk
    if n_pad:
        flat = jnp.pad(flat, (0, n_pad))
    return flat.reshape((n + n_pad) // _LANES, _LANES)


def _pick_tile_rows(rows, max_rows):
    """Largest multiple of 8 that divides `rows` and is <= max_rows."""
    t = min(rows, max_rows)
    t -= t % _SUBLANES
    t = max(_SUBLANES, t)
    while rows % t:
        t -= _SUBLANES
    return t


def _make_loss_kernel(n_levels, n_tiles, with_sc):
    refs_per_level = 4 if with_sc else 1
    stride = 3 if with_sc else 1

    def kernel(*refs):
        tgt_ref = refs[0]
        lvl_refs = refs[1:1 + refs_per_level * n_levels]
        out_ref = refs[1 + refs_per_level * n_levels]
        acc_ref = refs[2 + refs_per_level * n_levels] if with_sc else None
        i = pl.program_id(0)

        # rgb/targets slabs are VMEM-resident (constant block index): reduce
        # them once at the first grid step; also zero the VMEM accumulators.
        @pl.when(i == 0)
        def _init():
            if with_sc:
                acc_ref[...] = jnp.zeros_like(acc_ref)
            tgt = tgt_ref[...].astype(jnp.float32)
            for l in range(n_levels):
                rgb = lvl_refs[refs_per_level * l][...].astype(jnp.float32)
                d = rgb - tgt
                out_ref[stride * l] = jnp.sum(d * d)

        if with_sc:
            # Hot loop: pure elementwise VALU work into block-shaped VMEM
            # accumulators; no per-step XLU reduction, no SMEM scalar RMW.
            for l in range(n_levels):
                sun = lvl_refs[4 * l + 1][...].astype(jnp.float32)
                trans = lvl_refs[4 * l + 2][...].astype(jnp.float32)
                w = lvl_refs[4 * l + 3][...].astype(jnp.float32)
                dt = trans - sun
                acc_ref[2 * l] += dt * dt          # term2 partials
                acc_ref[2 * l + 1] += w * sun      # term3 partials

            # Single finalize: cross-lane/sublane reduction + SMEM writes.
            @pl.when(i == n_tiles - 1)
            def _finalize():
                for l in range(n_levels):
                    out_ref[3 * l + 1] = jnp.sum(acc_ref[2 * l])
                    out_ref[3 * l + 2] = jnp.sum(acc_ref[2 * l + 1])

    return kernel


def _loss_sums(targets, per_level, *, with_sc, max_tile_rows=1024):
    """One fused pallas_call over all levels.

    Returns f32[stride * n_levels] holding, per level:
      [sum((rgb - target)^2)]                                   (stride == 1)
      [sum((rgb - target)^2), sum((trans - sun)^2), sum(w*sun)] (stride == 3)
    """
    n_levels = len(per_level)
    stride = 3 if with_sc else 1

    tgt_lm = _to_lane_major(targets)
    rgb_rows = tgt_lm.shape[0]
    # rgb/targets stay fully VMEM-resident (constant block index); Pallas
    # fetches them once.  Fine for typical NeRF ray-batch sizes.
    rgb_spec = pl.BlockSpec((rgb_rows, _LANES), lambda i: (0, 0))

    args = [tgt_lm]
    in_specs = [rgb_spec]
    scratch_shapes = []

    if with_sc:
        s_rows = _to_lane_major(per_level[0][1]).shape[0]
        tile_s = _pick_tile_rows(s_rows, max_tile_rows)
        n_tiles = s_rows // tile_s
        s_spec = pl.BlockSpec((tile_s, _LANES), lambda i: (i, 0))
        scratch_shapes = [pltpu.VMEM((2 * n_levels, tile_s, _LANES), jnp.float32)]
        for rgb, sun, trans, w in per_level:
            args += [_to_lane_major(rgb), _to_lane_major(sun),
                     _to_lane_major(trans), _to_lane_major(w)]
            in_specs += [rgb_spec, s_spec, s_spec, s_spec]
    else:
        n_tiles = 1
        for (rgb,) in per_level:
            args.append(_to_lane_major(rgb))
            in_specs.append(rgb_spec)

    return pl.pallas_call(
        _make_loss_kernel(n_levels, n_tiles, with_sc),
        out_shape=jax.ShapeDtypeStruct((stride * n_levels,), jnp.float32),
        grid_spec=pltpu.PrefetchScalarGridSpec(
            num_scalar_prefetch=0,
            grid=(n_tiles,),
            in_specs=in_specs,
            out_specs=pl.BlockSpec(memory_space=pltpu.MemorySpace.SMEM),
            scratch_shapes=scratch_shapes,
        ),
        compiler_params=pltpu.CompilerParams(
            # Resident VMEM accumulators + SMEM output -> sequential grid axis.
            dimension_semantics=("arbitrary",),
        ),
    )(*args)


def snerf_loss(inputs, targets, lambda_sc=0.05, lambda_rgb=1.0, *,
               max_tile_rows=1024):
    """Pallas-backed equivalent of SNerfLoss.forward -> (loss, loss_dict)."""
    levels = ['coarse'] + (['fine'] if 'rgb_fine' in inputs else [])
    n, c = inputs['rgb_coarse'].shape
    with_sc = lambda_sc > 0
    stride = 3 if with_sc else 1

    per_level = []
    for typ in levels:
        rgb = inputs[f'rgb_{typ}']
        if with_sc:
            per_level.append((rgb,
                              _squeeze_sun(inputs[f'sun_sc_{typ}']),
                              inputs[f'transparency_sc_{typ}'],
                              inputs[f'weights_sc_{typ}']))
        else:
            per_level.append((rgb,))

    sums = _loss_sums(targets, per_level, with_sc=with_sc,
                      max_tile_rows=max_tile_rows)

    loss_dict = {}
    for l, typ in enumerate(levels):
        loss_dict[f'{typ}_color'] = sums[stride * l] / (n * c)   # MSE mean
        if with_sc:
            loss_dict[f'{typ}_sc_term2'] = (lambda_sc / 3.0) * (sums[stride * l + 1] / n)
            # mean(1 - sum_i w*sun) == 1 - mean(sum_i w*sun)
            loss_dict[f'{typ}_sc_term3'] = (lambda_sc / 3.0) * (1.0 - sums[stride * l + 2] / n)

    for k in list(loss_dict.keys()):
        loss_dict[k] = lambda_rgb * loss_dict[k]
    loss = sum(loss_dict.values())
    return loss, loss_dict


def _reference(inputs, targets, lambda_sc=0.05, lambda_rgb=1.0):
    """Pure-JAX reference mirroring the PyTorch module, for verification."""
    loss_dict = {}

    def one_level(typ):
        rgb = inputs[f'rgb_{typ}']
        loss_dict[f'{typ}_color'] = jnp.mean((rgb - targets) ** 2)
        if lambda_sc > 0:
            sun = _squeeze_sun(inputs[f'sun_sc_{typ}'])
            term2 = jnp.sum((inputs[f'transparency_sc_{typ}'] - sun) ** 2, -1)
            term3 = 1.0 - jnp.sum(inputs[f'weights_sc_{typ}'] * sun, -1)
            loss_dict[f'{typ}_sc_term2'] = lambda_sc / 3.0 * jnp.mean(term2)
            loss_dict[f'{typ}_sc_term3'] = lambda_sc / 3.0 * jnp.mean(term3)

    one_level('coarse')
    if 'rgb_fine' in inputs:
        one_level('fine')
    for k in list(loss_dict.keys()):
        loss_dict[k] = lambda_rgb * loss_dict[k]
    return sum(loss_dict.values()), loss_dict


if __name__ == "__main__":
    key = jax.random.PRNGKey(0)
    N, S, C = 256, 32, 3   # rays, samples-per-ray, rgb channels (small shapes)

    ks = jax.random.split(key, 9)
    inputs = {
        'rgb_coarse':             jax.random.uniform(ks[0], (N, C), jnp.float32),
        'sun_sc_coarse':          jax.random.uniform(ks[1], (N, S, 1), jnp.float32),
        'transparency_sc_coarse': jax.random.uniform(ks[2], (N, S), jnp.float32),
        'weights_sc_coarse':      jax.random.uniform(ks[3], (N, S), jnp.float32),
        'rgb_fine':               jax.random.uniform(ks[4], (N, C), jnp.float32),
        'sun_sc_fine':            jax.random.uniform(ks[5], (N, S, 1), jnp.float32),
        'transparency_sc_fine':   jax.random.uniform(ks[6], (N, S), jnp.float32),
        'weights_sc_fine':        jax.random.uniform(ks[7], (N, S), jnp.float32),
    }
    targets = jax.random.uniform(ks[8], (N, C), jnp.float32)

    ref_loss, ref_dict = _reference(inputs, targets)

    # Multi-tile path (grid of several steps) and single large-tile path.
    for kwargs in ({'max_tile_rows': 16}, {}):
        loss, loss_dict = snerf_loss(inputs, targets, **kwargs)
        loss = jax.block_until_ready(loss)
        assert jnp.allclose(loss, ref_loss, rtol=5e-5, atol=1e-6), (loss, ref_loss)
        for k in ref_dict:
            assert jnp.allclose(loss_dict[k], ref_dict[k], rtol=5e-5, atol=1e-6), k

    # Coarse-only path (no 'rgb_fine' in inputs).
    coarse_inputs = {k: v for k, v in inputs.items() if 'fine' not in k}
    ref_loss_c, ref_dict_c = _reference(coarse_inputs, targets)
    loss_c, dict_c = snerf_loss(coarse_inputs, targets)
    jax.block_until_ready(loss_c)
    assert jnp.allclose(loss_c, ref_loss_c, rtol=5e-5, atol=1e-6)
    for k in ref_dict_c:
        assert jnp.allclose(dict_c[k], ref_dict_c[k], rtol=5e-5, atol=1e-6), k

    print("KERNEL_OK")
</pallas_src>

<mosaic_0001>
module attributes {stable_mosaic.version = 11 : i64} {
  func.func @kernel(%arg0: i32, %arg1: memref<8x128xf32, #tpu.memory_space<vmem>>, %arg2: memref<8x128xf32, #tpu.memory_space<vmem>>, %arg3: memref<16x128xf32, #tpu.memory_space<vmem>>, %arg4: memref<16x128xf32, #tpu.memory_space<vmem>>, %arg5: memref<16x128xf32, #tpu.memory_space<vmem>>, %arg6: memref<8x128xf32, #tpu.memory_space<vmem>>, %arg7: memref<16x128xf32, #tpu.memory_space<vmem>>, %arg8: memref<16x128xf32, #tpu.memory_space<vmem>>, %arg9: memref<16x128xf32, #tpu.memory_space<vmem>>, %arg10: memref<6xf32, #tpu.memory_space<smem>>, %arg11: memref<4x16x128xf32, #tpu.memory_space<vmem>>) attributes {dimension_semantics = [#tpu.dimension_semantics<arbitrary>], iteration_bounds = array<i64: 4>, scalar_prefetch = 0 : i64, scratch_operands = 1 : i64, tpu.core_type = #tpu.core_type<tc>, window_params = [{pipeline_mode = #tpu.pipeline_mode<synchronous>, transform_indices = @transform_0, window_bounds = array<i64: 8, 128>}, {pipeline_mode = #tpu.pipeline_mode<synchronous>, transform_indices = @transform_1, window_bounds = array<i64: 8, 128>}, {transform_indices = @transform_2, window_bounds = array<i64: 16, 128>}, {transform_indices = @transform_3, window_bounds = array<i64: 16, 128>}, {transform_indices = @transform_4, window_bounds = array<i64: 16, 128>}, {pipeline_mode = #tpu.pipeline_mode<synchronous>, transform_indices = @transform_5, window_bounds = array<i64: 8, 128>}, {transform_indices = @transform_6, window_bounds = array<i64: 16, 128>}, {transform_indices = @transform_7, window_bounds = array<i64: 16, 128>}, {transform_indices = @transform_8, window_bounds = array<i64: 16, 128>}, {transform_indices = @transform_9, window_bounds = array<i64: 6>}]} {
    %c0_i32 = arith.constant 0 : i32
    %0 = arith.cmpi eq, %arg0, %c0_i32 : i32
    %1 = arith.extui %0 : i1 to i32
    %c0_i32_0 = arith.constant 0 : i32
    %2 = arith.cmpi ne, %1, %c0_i32_0 : i32
    scf.if %2 {
      %cst = arith.constant 0.000000e+00 : f32
      %42 = vector.broadcast %cst : f32 to vector<4x16x128xf32>
      %c0_34 = arith.constant 0 : index
      %c0_35 = arith.constant 0 : index
      %c0_36 = arith.constant 0 : index
      %43 = vector.load %arg11[%c0_34, %c0_35, %c0_36] : memref<4x16x128xf32, #tpu.memory_space<vmem>>, vector<4x16x128xf32>
      tpu.vector_store %arg11[%c0_34, %c0_35, %c0_36], %42 {strides = array<i32>} : memref<4x16x128xf32, #tpu.memory_space<vmem>>, vector<4x16x128xf32>,
      %c0_37 = arith.constant 0 : index
      %c0_38 = arith.constant 0 : index
      %44 = vector.load %arg1[%c0_37, %c0_38] : memref<8x128xf32, #tpu.memory_space<vmem>>, vector<8x128xf32>
      %c0_39 = arith.constant 0 : index
      %c0_40 = arith.constant 0 : index
      %45 = vector.load %arg2[%c0_39, %c0_40] : memref<8x128xf32, #tpu.memory_space<vmem>>, vector<8x128xf32>
      %46 = arith.subf %45, %44 : vector<8x128xf32>
      %47 = arith.mulf %46, %46 : vector<8x128xf32>
      %48 = vector.shape_cast %47 : vector<8x128xf32> to vector<1x8x128xf32>
      %cst_41 = arith.constant dense<0.000000e+00> : vector<1xf32>
      %49 = vector.multi_reduction <add>, %48, %cst_41 [1, 2] : vector<1x8x128xf32> to vector<1xf32>
      %50 = vector.shape_cast %49 : vector<1xf32> to vector<1x1x1xf32>
      %51 = vector.extract %50[0, 0, 0] : f32 from vector<1x1x1xf32>
      %c0_42 = arith.constant 0 : index
      %52 = memref.load %arg10[%c0_42] : memref<6xf32, #tpu.memory_space<smem>>
      memref.store %51, %arg10[%c0_42] : memref<6xf32, #tpu.memory_space<smem>>
      %c0_43 = arith.constant 0 : index
      %c0_44 = arith.constant 0 : index
      %53 = vector.load %arg6[%c0_43, %c0_44] : memref<8x128xf32, #tpu.memory_space<vmem>>, vector<8x128xf32>
      %54 = arith.subf %53, %44 : vector<8x128xf32>
      %55 = arith.mulf %54, %54 : vector<8x128xf32>
      %56 = vector.shape_cast %55 : vector<8x128xf32> to vector<1x8x128xf32>
      %cst_45 = arith.constant dense<0.000000e+00> : vector<1xf32>
      %57 = vector.multi_reduction <add>, %56, %cst_45 [1, 2] : vector<1x8x128xf32> to vector<1xf32>
      %58 = vector.shape_cast %57 : vector<1xf32> to vector<1x1x1xf32>
      %59 = vector.extract %58[0, 0, 0] : f32 from vector<1x1x1xf32>
      %c3_46 = arith.constant 3 : index
      %60 = memref.load %arg10[%c3_46] : memref<6xf32, #tpu.memory_space<smem>>
      memref.store %59, %arg10[%c3_46] : memref<6xf32, #tpu.memory_space<smem>>
    } else {
    }
    %c0 = arith.constant 0 : index
    %c0_1 = arith.constant 0 : index
    %3 = vector.load %arg3[%c0, %c0_1] : memref<16x128xf32, #tpu.memory_space<vmem>>, vector<16x128xf32>
    %c0_2 = arith.constant 0 : index
    %c0_3 = arith.constant 0 : index
    %4 = vector.load %arg4[%c0_2, %c0_3] : memref<16x128xf32, #tpu.memory_space<vmem>>, vector<16x128xf32>
    %c0_4 = arith.constant 0 : index
    %c0_5 = arith.constant 0 : index
    %5 = vector.load %arg5[%c0_4, %c0_5] : memref<16x128xf32, #tpu.memory_space<vmem>>, vector<16x128xf32>
    %6 = arith.subf %4, %3 : vector<16x128xf32>
    %c0_6 = arith.constant 0 : index
    %c0_7 = arith.constant 0 : index
    %c0_8 = arith.constant 0 : index
    %7 = vector.load %arg11[%c0_6, %c0_7, %c0_8] : memref<4x16x128xf32, #tpu.memory_space<vmem>>, vector<1x16x128xf32>
    %8 = vector.shape_cast %7 : vector<1x16x128xf32> to vector<16x128xf32>
    %9 = arith.mulf %6, %6 : vector<16x128xf32>
    %10 = arith.addf %8, %9 : vector<16x128xf32>
    %c0_9 = arith.constant 0 : index
    %c0_10 = arith.constant 0 : index
    %c0_11 = arith.constant 0 : index
    %11 = vector.load %arg11[%c0_9, %c0_10, %c0_11] : memref<4x16x128xf32, #tpu.memory_space<vmem>>, vector<1x16x128xf32>
    %12 = vector.shape_cast %11 : vector<1x16x128xf32> to vector<16x128xf32>
    %13 = vector.shape_cast %10 : vector<16x128xf32> to vector<1x16x128xf32>
    tpu.vector_store %arg11[%c0_9, %c0_10, %c0_11], %13 {strides = array<i32>} : memref<4x16x128xf32, #tpu.memory_space<vmem>>, vector<1x16x128xf32>,
    %c1 = arith.constant 1 : index
    %c0_12 = arith.constant 0 : index
    %c0_13 = arith.constant 0 : index
    %14 = vector.load %arg11[%c1, %c0_12, %c0_13] : memref<4x16x128xf32, #tpu.memory_space<vmem>>, vector<1x16x128xf32>
    %15 = vector.shape_cast %14 : vector<1x16x128xf32> to vector<16x128xf32>
    %16 = arith.mulf %5, %3 : vector<16x128xf32>
    %17 = arith.addf %15, %16 : vector<16x128xf32>
    %c1_14 = arith.constant 1 : index
    %c0_15 = arith.constant 0 : index
    %c0_16 = arith.constant 0 : index
    %18 = vector.load %arg11[%c1_14, %c0_15, %c0_16] : memref<4x16x128xf32, #tpu.memory_space<vmem>>, vector<1x16x128xf32>
    %19 = vector.shape_cast %18 : vector<1x16x128xf32> to vector<16x128xf32>
    %20 = vector.shape_cast %17 : vector<16x128xf32> to vector<1x16x128xf32>
    tpu.vector_store %arg11[%c1_14, %c0_15, %c0_16], %20 {strides = array<i32>} : memref<4x16x128xf32, #tpu.memory_space<vmem>>, vector<1x16x128xf32>,
    %c0_17 = arith.constant 0 : index
    %c0_18 = arith.constant 0 : index
    %21 = vector.load %arg7[%c0_17, %c0_18] : memref<16x128xf32, #tpu.memory_space<vmem>>, vector<16x128xf32>
    %c0_19 = arith.constant 0 : index
    %c0_20 = arith.constant 0 : index
    %22 = vector.load %arg8[%c0_19, %c0_20] : memref<16x128xf32, #tpu.memory_space<vmem>>, vector<16x128xf32>
    %c0_21 = arith.constant 0 : index
    %c0_22 = arith.constant 0 : index
    %23 = vector.load %arg9[%c0_21, %c0_22] : memref<16x128xf32, #tpu.memory_space<vmem>>, vector<16x128xf32>
    %24 = arith.subf %22, %21 : vector<16x128xf32>
    %c2 = arith.constant 2 : index
    %c0_23 = arith.constant 0 : index
    %c0_24 = arith.constant 0 : index
    %25 = vector.load %arg11[%c2, %c0_23, %c0_24] : memref<4x16x128xf32, #tpu.memory_space<vmem>>, vector<1x16x128xf32>
    %26 = vector.shape_cast %25 : vector<1x16x128xf32> to vector<16x128xf32>
    %27 = arith.mulf %24, %24 : vector<16x128xf32>
    %28 = arith.addf %26, %27 : vector<16x128xf32>
    %c2_25 = arith.constant 2 : index
    %c0_26 = arith.constant 0 : index
    %c0_27 = arith.constant 0 : index
    %29 = vector.load %arg11[%c2_25, %c0_26, %c0_27] : memref<4x16x128xf32, #tpu.memory_space<vmem>>, vector<1x16x128xf32>
    %30 = vector.shape_cast %29 : vector<1x16x128xf32> to vector<16x128xf32>
    %31 = vector.shape_cast %28 : vector<16x128xf32> to vector<1x16x128xf32>
    tpu.vector_store %arg11[%c2_25, %c0_26, %c0_27], %31 {strides = array<i32>} : memref<4x16x128xf32, #tpu.memory_space<vmem>>, vector<1x16x128xf32>,
    %c3 = arith.constant 3 : index
    %c0_28 = arith.constant 0 : index
    %c0_29 = arith.constant 0 : index
    %32 = vector.load %arg11[%c3, %c0_28, %c0_29] : memref<4x16x128xf32, #tpu.memory_space<vmem>>, vector<1x16x128xf32>
    %33 = vector.shape_cast %32 : vector<1x16x128xf32> to vector<16x128xf32>
    %34 = arith.mulf %23, %21 : vector<16x128xf32>
    %35 = arith.addf %33, %34 : vector<16x128xf32>
    %c3_30 = arith.constant 3 : index
    %c0_31 = arith.constant 0 : index
    %c0_32 = arith.constant 0 : index
    %36 = vector.load %arg11[%c3_30, %c0_31, %c0_32] : memref<4x16x128xf32, #tpu.memory_space<vmem>>, vector<1x16x128xf32>
    %37 = vector.shape_cast %36 : vector<1x16x128xf32> to vector<16x128xf32>
    %38 = vector.shape_cast %35 : vector<16x128xf32> to vector<1x16x128xf32>
    tpu.vector_store %arg11[%c3_30, %c0_31, %c0_32], %38 {strides = array<i32>} : memref<4x16x128xf32, #tpu.memory_space<vmem>>, vector<1x16x128xf32>,
    %c3_i32 = arith.constant 3 : i32
    %39 = arith.cmpi eq, %arg0, %c3_i32 : i32
    %40 = arith.extui %39 : i1 to i32
    %c0_i32_33 = arith.constant 0 : i32
    %41 = arith.cmpi ne, %40, %c0_i32_33 : i32
    scf.if %41 {
      %c0_34 = arith.constant 0 : index
      %c0_35 = arith.constant 0 : index
      %c0_36 = arith.constant 0 : index
      %42 = vector.load %arg11[%c0_34, %c0_35, %c0_36] : memref<4x16x128xf32, #tpu.memory_space<vmem>>, vector<1x16x128xf32>
      %43 = vector.shape_cast %42 : vector<1x16x128xf32> to vector<16x128xf32>
      %44 = vector.shape_cast %43 : vector<16x128xf32> to vector<1x16x128xf32>
      %cst = arith.constant dense<0.000000e+00> : vector<1xf32>
      %45 = vector.multi_reduction <add>, %44, %cst [1, 2] : vector<1x16x128xf32> to vector<1xf32>
      %46 = vector.shape_cast %45 : vector<1xf32> to vector<1x1x1xf32>
      %47 = vector.extract %46[0, 0, 0] : f32 from vector<1x1x1xf32>
      %c1_37 = arith.constant 1 : index
      %48 = memref.load %arg10[%c1_37] : memref<6xf32, #tpu.memory_space<smem>>
      memref.store %47, %arg10[%c1_37] : memref<6xf32, #tpu.memory_space<smem>>
      %c1_38 = arith.constant 1 : index
      %c0_39 = arith.constant 0 : index
      %c0_40 = arith.constant 0 : index
      %49 = vector.load %arg11[%c1_38, %c0_39, %c0_40] : memref<4x16x128xf32, #tpu.memory_space<vmem>>, vector<1x16x128xf32>
      %50 = vector.shape_cast %49 : vector<1x16x128xf32> to vector<16x128xf32>
      %51 = vector.shape_cast %50 : vector<16x128xf32> to vector<1x16x128xf32>
      %cst_41 = arith.constant dense<0.000000e+00> : vector<1xf32>
      %52 = vector.multi_reduction <add>, %51, %cst_41 [1, 2] : vector<1x16x128xf32> to vector<1xf32>
      %53 = vector.shape_cast %52 : vector<1xf32> to vector<1x1x1xf32>
      %54 = vector.extract %53[0, 0, 0] : f32 from vector<1x1x1xf32>
      %c2_42 = arith.constant 2 : index
      %55 = memref.load %arg10[%c2_42] : memref<6xf32, #tpu.memory_space<smem>>
      memref.store %54, %arg10[%c2_42] : memref<6xf32, #tpu.memory_space<smem>>
      %c2_43 = arith.constant 2 : index
      %c0_44 = arith.constant 0 : index
      %c0_45 = arith.constant 0 : index
      %56 = vector.load %arg11[%c2_43, %c0_44, %c0_45] : memref<4x16x128xf32, #tpu.memory_space<vmem>>, vector<1x16x128xf32>
      %57 = vector.shape_cast %56 : vector<1x16x128xf32> to vector<16x128xf32>
      %58 = vector.shape_cast %57 : vector<16x128xf32> to vector<1x16x128xf32>
      %cst_46 = arith.constant dense<0.000000e+00> : vector<1xf32>
      %59 = vector.multi_reduction <add>, %58, %cst_46 [1, 2] : vector<1x16x128xf32> to vector<1xf32>
      %60 = vector.shape_cast %59 : vector<1xf32> to vector<1x1x1xf32>
      %61 = vector.extract %60[0, 0, 0] : f32 from vector<1x1x1xf32>
      %c4 = arith.constant 4 : index
      %62 = memref.load %arg10[%c4] : memref<6xf32, #tpu.memory_space<smem>>
      memref.store %61, %arg10[%c4] : memref<6xf32, #tpu.memory_space<smem>>
      %c3_47 = arith.constant 3 : index
      %c0_48 = arith.constant 0 : index
      %c0_49 = arith.constant 0 : index
      %63 = vector.load %arg11[%c3_47, %c0_48, %c0_49] : memref<4x16x128xf32, #tpu.memory_space<vmem>>, vector<1x16x128xf32>
      %64 = vector.shape_cast %63 : vector<1x16x128xf32> to vector<16x128xf32>
      %65 = vector.shape_cast %64 : vector<16x128xf32> to vector<1x16x128xf32>
      %cst_50 = arith.constant dense<0.000000e+00> : vector<1xf32>
      %66 = vector.multi_reduction <add>, %65, %cst_50 [1, 2] : vector<1x16x128xf32> to vector<1xf32>
      %67 = vector.shape_cast %66 : vector<1xf32> to vector<1x1x1xf32>
      %68 = vector.extract %67[0, 0, 0] : f32 from vector<1x1x1xf32>
      %c5 = arith.constant 5 : index
      %69 = memref.load %arg10[%c5] : memref<6xf32, #tpu.memory_space<smem>>
      memref.store %68, %arg10[%c5] : memref<6xf32, #tpu.memory_space<smem>>
    } else {
    }
    return
  }
  func.func @transform_0(%arg0: i32) -> (i32, i32) {
    %c0_i32 = arith.constant 0 : i32
    %c0_i32_0 = arith.constant 0 : i32
    %c0_i32_1 = arith.constant 0 : i32
    return %c0_i32, %c0_i32_0 : i32, i32
  }
  func.func @transform_1(%arg0: i32) -> (i32, i32) {
    %c0_i32 = arith.constant 0 : i32
    %c0_i32_0 = arith.constant 0 : i32
    %c0_i32_1 = arith.constant 0 : i32
    return %c0_i32, %c0_i32_0 : i32, i32
  }
  func.func @transform_2(%arg0: i32) -> (i32, i32) {
    %c0_i32 = arith.constant 0 : i32
    %c0_i32_0 = arith.constant 0 : i32
    return %arg0, %c0_i32 : i32, i32
  }
  func.func @transform_3(%arg0: i32) -> (i32, i32) {
    %c0_i32 = arith.constant 0 : i32
    %c0_i32_0 = arith.constant 0 : i32
    return %arg0, %c0_i32 : i32, i32
  }
  func.func @transform_4(%arg0: i32) -> (i32, i32) {
    %c0_i32 = arith.constant 0 : i32
    %c0_i32_0 = arith.constant 0 : i32
    return %arg0, %c0_i32 : i32, i32
  }
  func.func @transform_5(%arg0: i32) -> (i32, i32) {
    %c0_i32 = arith.constant 0 : i32
    %c0_i32_0 = arith.constant 0 : i32
    %c0_i32_1 = arith.constant 0 : i32
    return %c0_i32, %c0_i32_0 : i32, i32
  }
  func.func @transform_6(%arg0: i32) -> (i32, i32) {
    %c0_i32 = arith.constant 0 : i32
    %c0_i32_0 = arith.constant 0 : i32
    return %arg0, %c0_i32 : i32, i32
  }
  func.func @transform_7(%arg0: i32) -> (i32, i32) {
    %c0_i32 = arith.constant 0 : i32
    %c0_i32_0 = arith.constant 0 : i32
    return %arg0, %c0_i32 : i32, i32
  }
  func.func @transform_8(%arg0: i32) -> (i32, i32) {
    %c0_i32 = arith.constant 0 : i32
    %c0_i32_0 = arith.constant 0 : i32
    return %arg0, %c0_i32 : i32, i32
  }
  func.func @transform_9(%arg0: i32) -> i32 {
    %c0_i32 = arith.constant 0 : i32
    %c0_i32_0 = arith.constant 0 : i32
    return %c0_i32 : i32
  }
}

</mosaic_0001>

<llo_original>
// kernel: tpu_custom_call.1
$region0: #{tpu_custom_call.1}
  #allocation0 [shape = 'u32[]', space=smem, size = 0x4, offset = 0x4, fixed_abs, tag = 'smem constant byte address 0x4 - core index']
  #allocation1 [shape = 'u32[144,128]{1,0:T(1,128)}', space=vmem, size = 0x12000, scoped, tag = 'internal scratch']
  #allocation2 [shape = 'f32[4,16,128]{2,1,0:T(8,128)}', space=vmem, size = 0x8000, scoped, tag = 'scratch operand']
  %s0 = inlined_call_operand.hbm [shape: f32[8,128], index: 0, kind: input, shape index: {}]
  %s1 = inlined_call_operand.hbm [shape: f32[8,128], index: 1, kind: input, shape index: {}]
  %s2 = inlined_call_operand.hbm [shape: f32[64,128], index: 2, kind: input, shape index: {}]
  %s3 = inlined_call_operand.hbm [shape: f32[64,128], index: 3, kind: input, shape index: {}]
  %s4 = inlined_call_operand.hbm [shape: f32[64,128], index: 4, kind: input, shape index: {}]
  %s5 = inlined_call_operand.vmem [shape: f32[8,128], index: 5, kind: input, shape index: {}]
  %s6 = inlined_call_operand.hbm [shape: f32[64,128], index: 6, kind: input, shape index: {}]
  %s7 = inlined_call_operand.hbm [shape: f32[64,128], index: 7, kind: input, shape index: {}]
  %s8 = inlined_call_operand.hbm [shape: f32[64,128], index: 8, kind: input, shape index: {}]
  %s9 = inlined_call_operand.hbm [shape: f32[6], index: 9, kind: output, shape index: {}]
  %s10 = sld [smem:[#allocation0]]
  $region109: #{tpu_custom_call.1} parent=0
    _
  %s12 = ssub.s32 1, %s10
  %s13 = scalar_select 0, %s12, %s10
  $region1: #{tpu_custom_call.1} parent=0
    #allocation3 [shape = 'u8[4096]{0}', space=vmem, size = 0x1000, scoped, tag = 'input window, operand 0, single buffered']
    #allocation4 [shape = 's32[2]{0}', space=sflag, size = 0x8, scoped, tag = 'scoped memory for tpu_custom_call.1']
    #allocation5 [shape = 's32[2]{0}', space=sflag, size = 0x8, scoped, tag = 'scoped memory for tpu_custom_call.1']
    #allocation6 [shape = 'u8[4096]{0}', space=vmem, size = 0x1000, scoped, tag = 'input window, operand 1, single buffered']
    #allocation7 [shape = 's32[1]{0}', space=sflag, size = 0x4, scoped, tag = 'scoped memory for tpu_custom_call.1']
    #allocation8 [shape = 'u8[16384]{0}', space=vmem, size = 0x4000, scoped, tag = 'input window, operand 2']
    #allocation9 [shape = 'u8[16384]{0}', space=vmem, size = 0x4000, scoped, tag = 'input window, operand 3']
    #allocation10 [shape = 'u8[16384]{0}', space=vmem, size = 0x4000, scoped, tag = 'input window, operand 4']
    #allocation11 [shape = 'u8[16384]{0}', space=vmem, size = 0x4000, scoped, tag = 'input window, operand 6']
    #allocation12 [shape = 'u8[16384]{0}', space=vmem, size = 0x4000, scoped, tag = 'input window, operand 7']
    #allocation13 [shape = 'u8[16384]{0}', space=vmem, size = 0x4000, scoped, tag = 'input window, operand 8']
    #allocation14 [shape = 'u8[512]{0}', space=smem, size = 0x200, scoped, tag = 'output window, operand 0, single buffered']
    %14 = vsyncpa [#allocation4], 0
    %15 = vsyncpa [#allocation7], 0
    %16 = vsyncpa [#allocation5], 0
    loop: start=0, step=1, limit=6
    $region2: #{tpu_custom_call.1} parent=1 // loop_pre_header
      _
    $region3: #{tpu_custom_call.1} parent=1 // loop_header
      %s18 = sphi 0, %s22
      %p19 = scmp.ge.s32.totalorder %s18, 6
      %s26 = sphi 0, %s26
      %s28 = sphi 0, %s26
      %s29 = sphi 0, %s28
      %s43 = sphi 0, %s29
      %s47 = sphi 0, %s47
      %s49 = sphi 0, %s47
      %s50 = sphi 0, %s49
      %s64 = sphi 0, %s50
      %s70 = sphi 0, %s72
      %s73 = sphi 0, %s70
      %s74 = sphi 0, %s73
      %s90 = sphi 0, %s74
      %s96 = sphi 0, %s98
      %s99 = sphi 0, %s96
      %s100 = sphi 0, %s99
      %s116 = sphi 0, %s100
      %s122 = sphi 0, %s124
      %s125 = sphi 0, %s122
      %s126 = sphi 0, %s125
      %s142 = sphi 0, %s126
      %s146 = sphi 0, %s146
      %s148 = sphi 0, %s146
      %s149 = sphi 0, %s148
      %s163 = sphi 0, %s149
      %s169 = sphi 0, %s171
      %s172 = sphi 0, %s169
      %s173 = sphi 0, %s172
      %s189 = sphi 0, %s173
      %s195 = sphi 0, %s197
      %s198 = sphi 0, %s195
      %s199 = sphi 0, %s198
      %s215 = sphi 0, %s199
      %s221 = sphi 0, %s223
      %s224 = sphi 0, %s221
      %s225 = sphi 0, %s224
      %s241 = sphi 0, %s225
      %s245 = sphi 0, %s245
      %s247 = sphi 0, %s245
      %s248 = sphi 0, %s247
      %s262 = sphi 0, %s248
    $region4: #{tpu_custom_call.1} parent=1 // loop_header_branch
      %21 = sbr.rel (%p19) target = $region8
    $region5: #{tpu_custom_call.1} parent=1 // loop_body
      %s23 = ssub.s32 %s18, 1
      %s24 = ssub.s32 %s18, 2
      %s25 = sadd.s32 %s18, 1
      %s27 = sadd.s32 %s26, 1
      %p30 = scmp.eq.s32.totalorder %s18, 3
      %p31 = scmp.ne.s32.totalorder %s26, %s28
      %p32 = scmp.eq.s32.totalorder %s18, 0
      %p33 = por %p31, %p32
      %p34 = scmp.ne.s32.totalorder %s26, %s28
      %p35 = scmp.eq.s32.totalorder %s23, 3
      %p36 = por %p34, %p35
      %p37 = scmp.ne.s32.totalorder %s28, %s29
      %p38 = scmp.eq.s32.totalorder %s23, 0
      %p39 = por %p37, %p38
      %p40 = scmp.ne.s32.totalorder %s28, %s29
      %p41 = scmp.eq.s32.totalorder %s24, 3
      %p42 = por %p40, %p41
      %p44 = scmp.ne.s32.totalorder %s29, %s43
      %p45 = scmp.eq.s32.totalorder %s24, 0
      %p46 = por %p44, %p45
      %s48 = sadd.s32 %s47, 1
      %p51 = scmp.eq.s32.totalorder %s18, 3
      %p52 = scmp.ne.s32.totalorder %s47, %s49
      %p53 = scmp.eq.s32.totalorder %s18, 0
      %p54 = por %p52, %p53
      %p55 = scmp.ne.s32.totalorder %s47, %s49
      %p56 = scmp.eq.s32.totalorder %s23, 3
      %p57 = por %p55, %p56
      %p58 = scmp.ne.s32.totalorder %s49, %s50
      %p59 = scmp.eq.s32.totalorder %s23, 0
      %p60 = por %p58, %p59
      %p61 = scmp.ne.s32.totalorder %s49, %s50
      %p62 = scmp.eq.s32.totalorder %s24, 3
      %p63 = por %p61, %p62
      %p65 = scmp.ne.s32.totalorder %s50, %s64
      %p66 = scmp.eq.s32.totalorder %s24, 0
      %p67 = por %p65, %p66
      %s68 = ssub.s32 %s18, %s25
      %p69 = scmp.eq.s32.totalorder %s68, 0
      %s71 = sadd.s32 %s70, 1
      %s72 = scalar_select %p69, %s70, %s71
      %p75 = pneg %p69
      %p76 = scmp.eq.s32.totalorder %s18, 3
      %p77 = por %p75, %p76
      %p78 = scmp.ne.s32.totalorder %s70, %s73
      %p79 = scmp.eq.s32.totalorder %s18, 0
      %p80 = por %p78, %p79
      %p81 = scmp.ne.s32.totalorder %s70, %s73
      %p82 = scmp.eq.s32.totalorder %s23, 3
      %p83 = por %p81, %p82
      %p84 = scmp.ne.s32.totalorder %s73, %s74
      %p85 = scmp.eq.s32.totalorder %s23, 0
      %p86 = por %p84, %p85
      %p87 = scmp.ne.s32.totalorder %s73, %s74
      %p88 = scmp.eq.s32.totalorder %s24, 3
      %p89 = por %p87, %p88
      %p91 = scmp.ne.s32.totalorder %s74, %s90
      %p92 = scmp.eq.s32.totalorder %s24, 0
      %p93 = por %p91, %p92
      %s94 = ssub.s32 %s18, %s25
      %p95 = scmp.eq.s32.totalorder %s94, 0
      %s97 = sadd.s32 %s96, 1
      %s98 = scalar_select %p95, %s96, %s97
      %p101 = pneg %p95
      %p102 = scmp.eq.s32.totalorder %s18, 3
      %p103 = por %p101, %p102
      %p104 = scmp.ne.s32.totalorder %s96, %s99
      %p105 = scmp.eq.s32.totalorder %s18, 0
      %p106 = por %p104, %p105
      %p107 = scmp.ne.s32.totalorder %s96, %s99
      %p108 = scmp.eq.s32.totalorder %s23, 3
      %p109 = por %p107, %p108
      %p110 = scmp.ne.s32.totalorder %s99, %s100
      %p111 = scmp.eq.s32.totalorder %s23, 0
      %p112 = por %p110, %p111
      %p113 = scmp.ne.s32.totalorder %s99, %s100
      %p114 = scmp.eq.s32.totalorder %s24, 3
      %p115 = por %p113, %p114
      %p117 = scmp.ne.s32.totalorder %s100, %s116
      %p118 = scmp.eq.s32.totalorder %s24, 0
      %p119 = por %p117, %p118
      %s120 = ssub.s32 %s18, %s25
      %p121 = scmp.eq.s32.totalorder %s120, 0
      %s123 = sadd.s32 %s122, 1
      %s124 = scalar_select %p121, %s122, %s123
      %p127 = pneg %p121
      %p128 = scmp.eq.s32.totalorder %s18, 3
      %p129 = por %p127, %p128
      %p130 = scmp.ne.s32.totalorder %s122, %s125
      %p131 = scmp.eq.s32.totalorder %s18, 0
      %p132 = por %p130, %p131
      %p133 = scmp.ne.s32.totalorder %s122, %s125
      %p134 = scmp.eq.s32.totalorder %s23, 3
      %p135 = por %p133, %p134
      %p136 = scmp.ne.s32.totalorder %s125, %s126
      %p137 = scmp.eq.s32.totalorder %s23, 0
      %p138 = por %p136, %p137
      %p139 = scmp.ne.s32.totalorder %s125, %s126
      %p140 = scmp.eq.s32.totalorder %s24, 3
      %p141 = por %p139, %p140
      %p143 = scmp.ne.s32.totalorder %s126, %s142
      %p144 = scmp.eq.s32.totalorder %s24, 0
      %p145 = por %p143, %p144
      %s147 = sadd.s32 %s146, 1
      %p150 = scmp.eq.s32.totalorder %s18, 3
      %p151 = scmp.ne.s32.totalorder %s146, %s148
      %p152 = scmp.eq.s32.totalorder %s18, 0
      %p153 = por %p151, %p152
      %p154 = scmp.ne.s32.totalorder %s146, %s148
      %p155 = scmp.eq.s32.totalorder %s23, 3
      %p156 = por %p154, %p155
      %p157 = scmp.ne.s32.totalorder %s148, %s149
      %p158 = scmp.eq.s32.totalorder %s23, 0
      %p159 = por %p157, %p158
      %p160 = scmp.ne.s32.totalorder %s148, %s149
      %p161 = scmp.eq.s32.totalorder %s24, 3
      %p162 = por %p160, %p161
      %p164 = scmp.ne.s32.totalorder %s149, %s163
      %p165 = scmp.eq.s32.totalorder %s24, 0
      %p166 = por %p164, %p165
      %s167 = ssub.s32 %s18, %s25
      %p168 = scmp.eq.s32.totalorder %s167, 0
      %s170 = sadd.s32 %s169, 1
      %s171 = scalar_select %p168, %s169, %s170
      %p174 = pneg %p168
      %p175 = scmp.eq.s32.totalorder %s18, 3
      %p176 = por %p174, %p175
      %p177 = scmp.ne.s32.totalorder %s169, %s172
      %p178 = scmp.eq.s32.totalorder %s18, 0
      %p179 = por %p177, %p178
      %p180 = scmp.ne.s32.totalorder %s169, %s172
      %p181 = scmp.eq.s32.totalorder %s23, 3
      %p182 = por %p180, %p181
      %p183 = scmp.ne.s32.totalorder %s172, %s173
      %p184 = scmp.eq.s32.totalorder %s23, 0
      %p185 = por %p183, %p184
      %p186 = scmp.ne.s32.totalorder %s172, %s173
      %p187 = scmp.eq.s32.totalorder %s24, 3
      %p188 = por %p186, %p187
      %p190 = scmp.ne.s32.totalorder %s173, %s189
      %p191 = scmp.eq.s32.totalorder %s24, 0
      %p192 = por %p190, %p191
      %s193 = ssub.s32 %s18, %s25
      %p194 = scmp.eq.s32.totalorder %s193, 0
      %s196 = sadd.s32 %s195, 1
      %s197 = scalar_select %p194, %s195, %s196
      %p200 = pneg %p194
      %p201 = scmp.eq.s32.totalorder %s18, 3
      %p202 = por %p200, %p201
      %p203 = scmp.ne.s32.totalorder %s195, %s198
      %p204 = scmp.eq.s32.totalorder %s18, 0
      %p205 = por %p203, %p204
      %p206 = scmp.ne.s32.totalorder %s195, %s198
      %p207 = scmp.eq.s32.totalorder %s23, 3
      %p208 = por %p206, %p207
      %p209 = scmp.ne.s32.totalorder %s198, %s199
      %p210 = scmp.eq.s32.totalorder %s23, 0
      %p211 = por %p209, %p210
      %p212 = scmp.ne.s32.totalorder %s198, %s199
      %p213 = scmp.eq.s32.totalorder %s24, 3
      %p214 = por %p212, %p213
      %p216 = scmp.ne.s32.totalorder %s199, %s215
      %p217 = scmp.eq.s32.totalorder %s24, 0
      %p218 = por %p216, %p217
      %s219 = ssub.s32 %s18, %s25
      %p220 = scmp.eq.s32.totalorder %s219, 0
      %s222 = sadd.s32 %s221, 1
      %s223 = scalar_select %p220, %s221, %s222
      %p226 = pneg %p220
      %p227 = scmp.eq.s32.totalorder %s18, 3
      %p228 = por %p226, %p227
      %p229 = scmp.ne.s32.totalorder %s221, %s224
      %p230 = scmp.eq.s32.totalorder %s18, 0
      %p231 = por %p229, %p230
      %p232 = scmp.ne.s32.totalorder %s221, %s224
      %p233 = scmp.eq.s32.totalorder %s23, 3
      %p234 = por %p232, %p233
      %p235 = scmp.ne.s32.totalorder %s224, %s225
      %p236 = scmp.eq.s32.totalorder %s23, 0
      %p237 = por %p235, %p236
      %p238 = scmp.ne.s32.totalorder %s224, %s225
      %p239 = scmp.eq.s32.totalorder %s24, 3
      %p240 = por %p238, %p239
      %p242 = scmp.ne.s32.totalorder %s225, %s241
      %p243 = scmp.eq.s32.totalorder %s24, 0
      %p244 = por %p242, %p243
      %s246 = sadd.s32 %s245, 1
      %p249 = scmp.eq.s32.totalorder %s18, 3
      %p250 = scmp.ne.s32.totalorder %s245, %s247
      %p251 = scmp.eq.s32.totalorder %s18, 0
      %p252 = por %p250, %p251
      %p253 = scmp.ne.s32.totalorder %s245, %s247
      %p254 = scmp.eq.s32.totalorder %s23, 3
      %p255 = por %p253, %p254
      %p256 = scmp.ne.s32.totalorder %s247, %s248
      %p257 = scmp.eq.s32.totalorder %s23, 0
      %p258 = por %p256, %p257
      %p259 = scmp.ne.s32.totalorder %s247, %s248
      %p260 = scmp.eq.s32.totalorder %s24, 3
      %p261 = por %p259, %p260
      %p263 = scmp.ne.s32.totalorder %s248, %s262
      %p264 = scmp.eq.s32.totalorder %s24, 0
      %p265 = por %p263, %p264
      %p266 = scmp.le.s32.totalorder 1, %s18
      %p267 = scmp.lt.s32.totalorder %s18, 5
      %p268 = pnand %p266, %p267
      %p269 = pneg %p268
      // Predicated region
      $region9: #{tpu_custom_call.1} parent=5 // pred_check
        _
      $region10: #{tpu_custom_call.1} parent=5 // pred_check_branch
        %271 = sbr.rel (%p268) target = $region12
      $region11: #{tpu_custom_call.1} parent=5 // pred_region
        %s272 = ssub.s32 %s18, 1
        // Predicated region
        $region13: #{tpu_custom_call.1} parent=11 // pred_check
          %p273 = pneg %p39
        $region14: #{tpu_custom_call.1} parent=11 // pred_check_branch
          %275 = sbr.rel (%p273) target = $region16
        $region15: #{tpu_custom_call.1} parent=11 // pred_region
          %s277 = ssub.s32 128, 128
          %278 = vsyncadd [#allocation4], %s277
          %s280 = sshll.u32 [#allocation3], 4
          %s281 = int_to_ptr.vmem [resolvable:$true] %s280
          %283 = dma.hbm_to_vmem [thread:$0]  %s0, 128, %s281, [#allocation4]
        $region16: #{tpu_custom_call.1} parent=11 // pred_fallthru
          _
        // Predicated region
        $region17: #{tpu_custom_call.1} parent=11 // pred_check
          %p284 = pneg %p60
        $region18: #{tpu_custom_call.1} parent=11 // pred_check_branch
          %286 = sbr.rel (%p284) target = $region20
        $region19: #{tpu_custom_call.1} parent=11 // pred_region
          %s288 = ssub.s32 128, 128
          %289 = vsyncadd [#allocation7], %s288
          %s291 = sshll.u32 [#allocation6], 4
          %s292 = int_to_ptr.vmem [resolvable:$true] %s291
          %294 = dma.hbm_to_vmem [thread:$0]  %s1, 128, %s292, [#allocation7]
        $region20: #{tpu_custom_call.1} parent=11 // pred_fallthru
          _
        // Predicated region
        $region21: #{tpu_custom_call.1} parent=11 // pred_check
          %p295 = pneg %p159
        $region22: #{tpu_custom_call.1} parent=11 // pred_check_branch
          %297 = sbr.rel (%p295) target = $region24
        $region23: #{tpu_custom_call.1} parent=11 // pred_region
          _
        $region24: #{tpu_custom_call.1} parent=11 // pred_fallthru
          _
      $region12: #{tpu_custom_call.1} parent=5 // pred_fallthru
        _
      %p298 = scmp.lt.s32.totalorder %s18, 4
      // Predicated region
      $region25: #{tpu_custom_call.1} parent=5 // pred_check
        %p299 = pneg %p298
      $region26: #{tpu_custom_call.1} parent=5 // pred_check_branch
        %301 = sbr.rel (%p299) target = $region28
      $region27: #{tpu_custom_call.1} parent=5 // pred_region
        // Predicated region
        $region29: #{tpu_custom_call.1} parent=27 // pred_check
          %p302 = pneg %p80
        $region30: #{tpu_custom_call.1} parent=27 // pred_check_branch
          %304 = sbr.rel (%p302) target = $region32
        $region31: #{tpu_custom_call.1} parent=27 // pred_region
          %s305 = sand.u32 %s18, 1
          %s306 = scalar_lea.sflag [#allocation4], %s305
          %s307 = sand.u32 %s70, 1
          %s308 = smul.addr %s307, 16
          %s309 = scalar_lea.vmem [#allocation8], %s308
          %s310 = smul.u32 2, %s18
          %s312 = ssub.s32 256, 256
          %313 = vsyncadd %s306, %s312
          %s314 = smul.addr %s310, 128
          %s315 = scalar_lea.hbm %s2, %s314
          %s316 = sshll.u32 %s309, 4
          %s317 = int_to_ptr.vmem [resolvable:$true] %s316
          %322 = dma.hbm_to_vmem [thread:$0]  %s315, 256, %s317, %s306, 128, 128, 8
        $region32: #{tpu_custom_call.1} parent=27 // pred_fallthru
          _
        // Predicated region
        $region33: #{tpu_custom_call.1} parent=27 // pred_check
          %p323 = pneg %p106
        $region34: #{tpu_custom_call.1} parent=27 // pred_check_branch
          %325 = sbr.rel (%p323) target = $region36
        $region35: #{tpu_custom_call.1} parent=27 // pred_region
          %s326 = sand.u32 %s18, 1
          %s327 = scalar_lea.sflag [#allocation4], %s326
          %s328 = sand.u32 %s96, 1
          %s329 = smul.addr %s328, 16
          %s330 = scalar_lea.vmem [#allocation9], %s329
          %s331 = smul.u32 2, %s18
          %s333 = ssub.s32 256, 256
          %334 = vsyncadd %s327, %s333
          %s335 = smul.addr %s331, 128
          %s336 = scalar_lea.hbm %s3, %s335
          %s337 = sshll.u32 %s330, 4
          %s338 = int_to_ptr.vmem [resolvable:$true] %s337
          %343 = dma.hbm_to_vmem [thread:$0]  %s336, 256, %s338, %s327, 128, 128, 8
        $region36: #{tpu_custom_call.1} parent=27 // pred_fallthru
          _
        // Predicated region
        $region37: #{tpu_custom_call.1} parent=27 // pred_check
          %p344 = pneg %p132
        $region38: #{tpu_custom_call.1} parent=27 // pred_check_branch
          %346 = sbr.rel (%p344) target = $region40
        $region39: #{tpu_custom_call.1} parent=27 // pred_region
          %s347 = sand.u32 %s18, 1
          %s348 = scalar_lea.sflag [#allocation4], %s347
          %s349 = sand.u32 %s122, 1
          %s350 = smul.addr %s349, 16
          %s351 = scalar_lea.vmem [#allocation10], %s350
          %s352 = smul.u32 2, %s18
          %s354 = ssub.s32 256, 256
          %355 = vsyncadd %s348, %s354
          %s356 = smul.addr %s352, 128
          %s357 = scalar_lea.hbm %s4, %s356
          %s358 = sshll.u32 %s351, 4
          %s359 = int_to_ptr.vmem [resolvable:$true] %s358
          %364 = dma.hbm_to_vmem [thread:$0]  %s357, 256, %s359, %s348, 128, 128, 8
        $region40: #{tpu_custom_call.1} parent=27 // pred_fallthru
          _
        // Predicated region
        $region41: #{tpu_custom_call.1} parent=27 // pred_check
          %p365 = pneg %p179
        $region42: #{tpu_custom_call.1} parent=27 // pred_check_branch
          %367 = sbr.rel (%p365) target = $region44
        $region43: #{tpu_custom_call.1} parent=27 // pred_region
          %s368 = sand.u32 %s18, 1
          %s369 = scalar_lea.sflag [#allocation4], %s368
          %s370 = sand.u32 %s169, 1
          %s371 = smul.addr %s370, 16
          %s372 = scalar_lea.vmem [#allocation11], %s371
          %s373 = smul.u32 2, %s18
          %s375 = ssub.s32 256, 256
          %376 = vsyncadd %s369, %s375
          %s377 = smul.addr %s373, 128
          %s378 = scalar_lea.hbm %s6, %s377
          %s379 = sshll.u32 %s372, 4
          %s380 = int_to_ptr.vmem [resolvable:$true] %s379
          %385 = dma.hbm_to_vmem [thread:$0]  %s378, 256, %s380, %s369, 128, 128, 8
        $region44: #{tpu_custom_call.1} parent=27 // pred_fallthru
          _
        // Predicated region
        $region45: #{tpu_custom_call.1} parent=27 // pred_check
          %p386 = pneg %p205
        $region46: #{tpu_custom_call.1} parent=27 // pred_check_branch
          %388 = sbr.rel (%p386) target = $region48
        $region47: #{tpu_custom_call.1} parent=27 // pred_region
          %s389 = sand.u32 %s18, 1
          %s390 = scalar_lea.sflag [#allocation4], %s389
          %s391 = sand.u32 %s195, 1
          %s392 = smul.addr %s391, 16
          %s393 = scalar_lea.vmem [#allocation12], %s392
          %s394 = smul.u32 2, %s18
          %s396 = ssub.s32 256, 256
          %397 = vsyncadd %s390, %s396
          %s398 = smul.addr %s394, 128
          %s399 = scalar_lea.hbm %s7, %s398
          %s400 = sshll.u32 %s393, 4
          %s401 = int_to_ptr.vmem [resolvable:$true] %s400
          %406 = dma.hbm_to_vmem [thread:$0]  %s399, 256, %s401, %s390, 128, 128, 8
        $region48: #{tpu_custom_call.1} parent=27 // pred_fallthru
          _
        // Predicated region
        $region49: #{tpu_custom_call.1} parent=27 // pred_check
          %p407 = pneg %p231
        $region50: #{tpu_custom_call.1} parent=27 // pred_check_branch
          %409 = sbr.rel (%p407) target = $region52
        $region51: #{tpu_custom_call.1} parent=27 // pred_region
          %s410 = sand.u32 %s18, 1
          %s411 = scalar_lea.sflag [#allocation4], %s410
          %s412 = sand.u32 %s221, 1
          %s413 = smul.addr %s412, 16
          %s414 = scalar_lea.vmem [#allocation13], %s413
          %s415 = smul.u32 2, %s18
          %s417 = ssub.s32 256, 256
          %418 = vsyncadd %s411, %s417
          %s419 = smul.addr %s415, 128
          %s420 = scalar_lea.hbm %s8, %s419
          %s421 = sshll.u32 %s414, 4
          %s422 = int_to_ptr.vmem [resolvable:$true] %s421
          %427 = dma.hbm_to_vmem [thread:$0]  %s420, 256, %s422, %s411, 128, 128, 8
        $region52: #{tpu_custom_call.1} parent=27 // pred_fallthru
          _
      $region28: #{tpu_custom_call.1} parent=5 // pred_fallthru
        _
      %p428 = scmp.le.s32.totalorder 1, %s18
      %p429 = scmp.lt.s32.totalorder %s18, 5
      %p430 = pnand %p428, %p429
      %p431 = pneg %p430
      // Predicated region
      $region53: #{tpu_custom_call.1} parent=5 // pred_check
        _
      $region54: #{tpu_custom_call.1} parent=5 // pred_check_branch
        %433 = sbr.rel (%p430) target = $region56
      $region55: #{tpu_custom_call.1} parent=5 // pred_region
        %s434 = ssub.s32 %s18, 1
        // Predicated region
        $region57: #{tpu_custom_call.1} parent=55 // pred_check
          %p435 = pneg %p39
        $region58: #{tpu_custom_call.1} parent=55 // pred_check_branch
          %437 = sbr.rel (%p435) target = $region60
        $region59: #{tpu_custom_call.1} parent=55 // pred_region
          %438 = dma.done [#allocation4], 128
        $region60: #{tpu_custom_call.1} parent=55 // pred_fallthru
          _
        // Predicated region
        $region61: #{tpu_custom_call.1} parent=55 // pred_check
          %p439 = pneg %p60
        $region62: #{tpu_custom_call.1} parent=55 // pred_check_branch
          %441 = sbr.rel (%p439) target = $region64
        $region63: #{tpu_custom_call.1} parent=55 // pred_region
          %442 = dma.done [#allocation7], 128
        $region64: #{tpu_custom_call.1} parent=55 // pred_fallthru
          _
        %s443 = sand.u32 %s23, 1
        %s444 = scalar_lea.sflag [#allocation4], %s443
        %s445 = sand.u32 %s73, 1
        %s446 = smul.addr %s445, 16
        %s447 = scalar_lea.vmem [#allocation8], %s446
        // Predicated region
        $region65: #{tpu_custom_call.1} parent=55 // pred_check
          %p448 = pneg %p86
        $region66: #{tpu_custom_call.1} parent=55 // pred_check_branch
          %450 = sbr.rel (%p448) target = $region68
        $region67: #{tpu_custom_call.1} parent=55 // pred_region
          %451 = dma.done %s444, 256
        $region68: #{tpu_custom_call.1} parent=55 // pred_fallthru
          _
        %s452 = sand.u32 %s23, 1
        %s453 = scalar_lea.sflag [#allocation4], %s452
        %s454 = sand.u32 %s99, 1
        %s455 = smul.addr %s454, 16
        %s456 = scalar_lea.vmem [#allocation9], %s455
        // Predicated region
        $region69: #{tpu_custom_call.1} parent=55 // pred_check
          %p457 = pneg %p112
        $region70: #{tpu_custom_call.1} parent=55 // pred_check_branch
          %459 = sbr.rel (%p457) target = $region72
        $region71: #{tpu_custom_call.1} parent=55 // pred_region
          %460 = dma.done %s453, 256
        $region72: #{tpu_custom_call.1} parent=55 // pred_fallthru
          _
        %s461 = sand.u32 %s23, 1
        %s462 = scalar_lea.sflag [#allocation4], %s461
        %s463 = sand.u32 %s125, 1
        %s464 = smul.addr %s463, 16
        %s465 = scalar_lea.vmem [#allocation10], %s464
        // Predicated region
        $region73: #{tpu_custom_call.1} parent=55 // pred_check
          %p466 = pneg %p138
        $region74: #{tpu_custom_call.1} parent=55 // pred_check_branch
          %468 = sbr.rel (%p466) target = $region76
        $region75: #{tpu_custom_call.1} parent=55 // pred_region
          %469 = dma.done %s462, 256
        $region76: #{tpu_custom_call.1} parent=55 // pred_fallthru
          _
        %s470 = sand.u32 %s23, 1
        %s471 = scalar_lea.sflag [#allocation4], %s470
        %s472 = sand.u32 %s172, 1
        %s473 = smul.addr %s472, 16
        %s474 = scalar_lea.vmem [#allocation11], %s473
        // Predicated region
        $region77: #{tpu_custom_call.1} parent=55 // pred_check
          %p475 = pneg %p185
        $region78: #{tpu_custom_call.1} parent=55 // pred_check_branch
          %477 = sbr.rel (%p475) target = $region80
        $region79: #{tpu_custom_call.1} parent=55 // pred_region
          %478 = dma.done %s471, 256
        $region80: #{tpu_custom_call.1} parent=55 // pred_fallthru
          _
        %s479 = sand.u32 %s23, 1
        %s480 = scalar_lea.sflag [#allocation4], %s479
        %s481 = sand.u32 %s198, 1
        %s482 = smul.addr %s481, 16
        %s483 = scalar_lea.vmem [#allocation12], %s482
        // Predicated region
        $region81: #{tpu_custom_call.1} parent=55 // pred_check
          %p484 = pneg %p211
        $region82: #{tpu_custom_call.1} parent=55 // pred_check_branch
          %486 = sbr.rel (%p484) target = $region84
        $region83: #{tpu_custom_call.1} parent=55 // pred_region
          %487 = dma.done %s480, 256
        $region84: #{tpu_custom_call.1} parent=55 // pred_fallthru
          _
        %s488 = sand.u32 %s23, 1
        %s489 = scalar_lea.sflag [#allocation4], %s488
        %s490 = sand.u32 %s224, 1
        %s491 = smul.addr %s490, 16
        %s492 = scalar_lea.vmem [#allocation13], %s491
        // Predicated region
        $region85: #{tpu_custom_call.1} parent=55 // pred_check
          %p493 = pneg %p237
        $region86: #{tpu_custom_call.1} parent=55 // pred_check_branch
          %495 = sbr.rel (%p493) target = $region88
        $region87: #{tpu_custom_call.1} parent=55 // pred_region
          %496 = dma.done %s489, 256
        $region88: #{tpu_custom_call.1} parent=55 // pred_fallthru
          _
        %p497 = pneg %p39
        %p498 = pneg %p36
        %p499 = pneg %p60
        %p500 = pneg %p57
        %s501 = sand.u32 %s23, 1
        %s502 = scalar_lea.sflag [#allocation4], %s501
        %s503 = sand.u32 %s73, 1
        %s504 = smul.addr %s503, 16
        %s505 = scalar_lea.vmem [#allocation8], %s504
        %p506 = pneg %p86
        %p507 = pneg %p83
        %s508 = sand.u32 %s23, 1
        %s509 = scalar_lea.sflag [#allocation4], %s508
        %s510 = sand.u32 %s99, 1
        %s511 = smul.addr %s510, 16
        %s512 = scalar_lea.vmem [#allocation9], %s511
        %p513 = pneg %p112
        %p514 = pneg %p109
        %s515 = sand.u32 %s23, 1
        %s516 = scalar_lea.sflag [#allocation4], %s515
        %s517 = sand.u32 %s125, 1
        %s518 = smul.addr %s517, 16
        %s519 = scalar_lea.vmem [#allocation10], %s518
        %p520 = pneg %p138
        %p521 = pneg %p135
        %p522 = pneg %p159
        %p523 = pneg %p156
        %s524 = sand.u32 %s23, 1
        %s525 = scalar_lea.sflag [#allocation4], %s524
        %s526 = sand.u32 %s172, 1
        %s527 = smul.addr %s526, 16
        %s528 = scalar_lea.vmem [#allocation11], %s527
        %p529 = pneg %p185
        %p530 = pneg %p182
        %s531 = sand.u32 %s23, 1
        %s532 = scalar_lea.sflag [#allocation4], %s531
        %s533 = sand.u32 %s198, 1
        %s534 = smul.addr %s533, 16
        %s535 = scalar_lea.vmem [#allocation12], %s534
        %p536 = pneg %p211
        %p537 = pneg %p208
        %s538 = sand.u32 %s23, 1
        %s539 = scalar_lea.sflag [#allocation4], %s538
        %s540 = sand.u32 %s224, 1
        %s541 = smul.addr %s540, 16
        %s542 = scalar_lea.vmem [#allocation13], %s541
        %p543 = pneg %p237
        %p544 = pneg %p234
        %p545 = pneg %p258
        %p546 = pneg %p255
        %s547 = smul.u32 2, %s23
        %s548 = smul.u32 2, %s23
        %s549 = smul.u32 2, %s23
        %s550 = smul.u32 2, %s23
        %s551 = smul.u32 2, %s23
        %s552 = smul.u32 2, %s23
        %p553 = scmp.eq.s32.totalorder %s23, 0
        // Predicated region
        $region89: #{tpu_custom_call.1} parent=55 // pred_check
          %p554 = pneg %p553
        $region90: #{tpu_custom_call.1} parent=55 // pred_check_branch
          %556 = sbr.rel (%p554) target = $region92
        $region91: #{tpu_custom_call.1} parent=55 // pred_region
          %557 = vst [vmem:[#allocation2] sm:$0xff] 0.0
          %558 = vst [vmem:[#allocation2 + $0x8] sm:$0xff] 0.0
          %559 = vst [vmem:[#allocation2 + $0x10] sm:$0xff] 0.0
          %560 = vst [vmem:[#allocation2 + $0x18] sm:$0xff] 0.0
          %561 = vst [vmem:[#allocation2 + $0x20] sm:$0xff] 0.0
          %562 = vst [vmem:[#allocation2 + $0x28] sm:$0xff] 0.0
          %563 = vst [vmem:[#allocation2 + $0x30] sm:$0xff] 0.0
          %564 = vst [vmem:[#allocation2 + $0x38] sm:$0xff] 0.0
          %v565 = vld [vmem:[#allocation3] sm:$0xff]
          %v566 = vld [vmem:[#allocation6] sm:$0xff]
          %v567 = vsub.f32 %v566, %v565
          %v568 = vmul.f32 %v567, %v567
          %569 = vadd.xlane.f32.xlu0 %v568
          %v570 = vpop.xlane.xlu0 %569
          %v571 = vrot.slane %v570, 4
          %v572 = vadd.f32 %v570, %v571
          %v573 = vrot.slane %v572, 2
          %v574 = vadd.f32 %v572, %v573
          %v575 = vrot.slane %v574, 1
          %v576 = vadd.f32 %v574, %v575
          %s577 = vtos %v576
          %s578 = scalar_lea.smem [#allocation14], 0
          %579 = sst [smem:[%s578]] %s577
          %v580 = vld [vmem:[%s5] sm:$0xff]
          %v581 = vsub.f32 %v580, %v565
          %v582 = vmul.f32 %v581, %v581
          %583 = vadd.xlane.f32.xlu0 %v582
          %v584 = vpop.xlane.xlu0 %583
          %v585 = vrot.slane %v584, 4
          %v586 = vadd.f32 %v584, %v585
          %v587 = vrot.slane %v586, 2
          %v588 = vadd.f32 %v586, %v587
          %v589 = vrot.slane %v588, 1
          %v590 = vadd.f32 %v588, %v589
          %s591 = vtos %v590
          %s592 = scalar_lea.smem [#allocation14], 3
          %593 = sst [smem:[%s592]] %s591
        $region92: #{tpu_custom_call.1} parent=55 // pred_fallthru
          _
        %v594 = vld [vmem:[%s447] sm:$0xff]
        %v595 = vld [vmem:[%s447 + $0x8] sm:$0xff]
        %v596 = vld [vmem:[%s456] sm:$0xff]
        %v597 = vld [vmem:[%s456 + $0x8] sm:$0xff]
        %v598 = vld [vmem:[%s465] sm:$0xff]
        %v599 = vld [vmem:[%s465 + $0x8] sm:$0xff]
        %v600 = vsub.f32 %v596, %v594
        %v601 = vsub.f32 %v597, %v595
        %v602 = vld [vmem:[#allocation2] sm:$0xff]
        %v603 = vld [vmem:[#allocation2 + $0x8] sm:$0xff]
        %v604 = vmul.f32 %v600, %v600
        %v605 = vmul.f32 %v601, %v601
        %v606 = vadd.f32 %v602, %v604
        %v607 = vadd.f32 %v603, %v605
        %608 = vst [vmem:[#allocation2] sm:$0xff] %v606
        %609 = vst [vmem:[#allocation2 + $0x8] sm:$0xff] %v607
        %s610 = scalar_lea.vmem [#allocation2], 16
        %v611 = vld [vmem:[%s610] sm:$0xff]
        %v612 = vld [vmem:[%s610 + $0x8] sm:$0xff]
        %v613 = vmul.f32 %v598, %v594
        %v614 = vmul.f32 %v599, %v595
        %v615 = vadd.f32 %v611, %v613
        %v616 = vadd.f32 %v612, %v614
        %617 = vst [vmem:[%s610] sm:$0xff] %v615
        %618 = vst [vmem:[%s610 + $0x8] sm:$0xff] %v616
        %v619 = vld [vmem:[%s474] sm:$0xff]
        %v620 = vld [vmem:[%s474 + $0x8] sm:$0xff]
        %v621 = vld [vmem:[%s483] sm:$0xff]
        %v622 = vld [vmem:[%s483 + $0x8] sm:$0xff]
        %v623 = vld [vmem:[%s492] sm:$0xff]
        %v624 = vld [vmem:[%s492 + $0x8] sm:$0xff]
        %v625 = vsub.f32 %v621, %v619
        %v626 = vsub.f32 %v622, %v620
        %s627 = scalar_lea.vmem [#allocation2], 32
        %v628 = vld [vmem:[%s627] sm:$0xff]
        %v629 = vld [vmem:[%s627 + $0x8] sm:$0xff]
        %v630 = vmul.f32 %v625, %v625
        %v631 = vmul.f32 %v626, %v626
        %v632 = vadd.f32 %v628, %v630
        %v633 = vadd.f32 %v629, %v631
        %634 = vst [vmem:[%s627] sm:$0xff] %v632
        %635 = vst [vmem:[%s627 + $0x8] sm:$0xff] %v633
        %s636 = scalar_lea.vmem [#allocation2], 48
        %v637 = vld [vmem:[%s636] sm:$0xff]
        %v638 = vld [vmem:[%s636 + $0x8] sm:$0xff]
        %v639 = vmul.f32 %v623, %v619
        %v640 = vmul.f32 %v624, %v620
        %v641 = vadd.f32 %v637, %v639
        %v642 = vadd.f32 %v638, %v640
        %643 = vst [vmem:[%s636] sm:$0xff] %v641
        %644 = vst [vmem:[%s636 + $0x8] sm:$0xff] %v642
        %p645 = scmp.eq.s32.totalorder %s23, 3
        // Predicated region
        $region93: #{tpu_custom_call.1} parent=55 // pred_check
          %p646 = pneg %p645
        $region94: #{tpu_custom_call.1} parent=55 // pred_check_branch
          %648 = sbr.rel (%p646) target = $region96
        $region95: #{tpu_custom_call.1} parent=55 // pred_region
          %v649 = vld [vmem:[#allocation2] sm:$0xff]
          %v650 = vld [vmem:[#allocation2 + $0x8] sm:$0xff]
          %v651 = vadd.f32 %v649, %v650
          %652 = vadd.xlane.f32.xlu0 %v651
          %v653 = vpop.xlane.xlu0 %652
          %v654 = vrot.slane %v653, 4
          %v655 = vadd.f32 %v653, %v654
          %v656 = vrot.slane %v655, 2
          %v657 = vadd.f32 %v655, %v656
          %v658 = vrot.slane %v657, 1
          %v659 = vadd.f32 %v657, %v658
          %s660 = vtos %v659
          %s661 = scalar_lea.smem [#allocation14], 1
          %662 = sst [smem:[%s661]] %s660
          %v663 = vld [vmem:[%s610] sm:$0xff]
          %v664 = vld [vmem:[%s610 + $0x8] sm:$0xff]
          %v665 = vadd.f32 %v663, %v664
          %666 = vadd.xlane.f32.xlu0 %v665
          %v667 = vpop.xlane.xlu0 %666
          %v668 = vrot.slane %v667, 4
          %v669 = vadd.f32 %v667, %v668
          %v670 = vrot.slane %v669, 2
          %v671 = vadd.f32 %v669, %v670
          %v672 = vrot.slane %v671, 1
          %v673 = vadd.f32 %v671, %v672
          %s674 = vtos %v673
          %s675 = scalar_lea.smem [#allocation14], 2
          %676 = sst [smem:[%s675]] %s674
          %v677 = vld [vmem:[%s627] sm:$0xff]
          %v678 = vld [vmem:[%s627 + $0x8] sm:$0xff]
          %v679 = vadd.f32 %v677, %v678
          %680 = vadd.xlane.f32.xlu0 %v679
          %v681 = vpop.xlane.xlu0 %680
          %v682 = vrot.slane %v681, 4
          %v683 = vadd.f32 %v681, %v682
          %v684 = vrot.slane %v683, 2
          %v685 = vadd.f32 %v683, %v684
          %v686 = vrot.slane %v685, 1
          %v687 = vadd.f32 %v685, %v686
          %s688 = vtos %v687
          %s689 = scalar_lea.smem [#allocation14], 4
          %690 = sst [smem:[%s689]] %s688
          %v691 = vld [vmem:[%s636] sm:$0xff]
          %v692 = vld [vmem:[%s636 + $0x8] sm:$0xff]
          %v693 = vadd.f32 %v691, %v692
          %694 = vadd.xlane.f32.xlu0 %v693
          %v695 = vpop.xlane.xlu0 %694
          %v696 = vrot.slane %v695, 4
          %v697 = vadd.f32 %v695, %v696
          %v698 = vrot.slane %v697, 2
          %v699 = vadd.f32 %v697, %v698
          %v700 = vrot.slane %v699, 1
          %v701 = vadd.f32 %v699, %v700
          %s702 = vtos %v701
          %s703 = scalar_lea.smem [#allocation14], 5
          %704 = sst [smem:[%s703]] %s702
        $region96: #{tpu_custom_call.1} parent=55 // pred_fallthru
          _
        // Predicated region
        $region97: #{tpu_custom_call.1} parent=55 // pred_check
          %p705 = pneg %p255
        $region98: #{tpu_custom_call.1} parent=55 // pred_check_branch
          %707 = sbr.rel (%p705) target = $region100
        $region99: #{tpu_custom_call.1} parent=55 // pred_region
          %s709 = ssub.s32 16, 16
          %710 = vsyncadd [#allocation5], %s709
          %713 = dma.smem_to_hbm [#allocation14], 16, %s9, [#allocation5]
        $region100: #{tpu_custom_call.1} parent=55 // pred_fallthru
          _
        // Predicated region
        $region101: #{tpu_custom_call.1} parent=55 // pred_check
          %p714 = pneg %p255
        $region102: #{tpu_custom_call.1} parent=55 // pred_check_branch
          %716 = sbr.rel (%p714) target = $region104
        $region103: #{tpu_custom_call.1} parent=55 // pred_region
          %717 = dma.done [#allocation5], 16
        $region104: #{tpu_custom_call.1} parent=55 // pred_fallthru
          _
        %718 = sfence
      $region56: #{tpu_custom_call.1} parent=5 // pred_fallthru
        _
      %p719 = scmp.le.s32.totalorder 2, %s18
      // Predicated region
      $region105: #{tpu_custom_call.1} parent=5 // pred_check
        %p720 = pneg %p719
      $region106: #{tpu_custom_call.1} parent=5 // pred_check_branch
        %722 = sbr.rel (%p720) target = $region108
      $region107: #{tpu_custom_call.1} parent=5 // pred_region
        %s723 = ssub.s32 %s18, 2
      $region108: #{tpu_custom_call.1} parent=5 // pred_fallthru
        _
    $region6: #{tpu_custom_call.1} parent=1 // loop_footer
      %s22 = sadd.s32 1, %s18
    $region7: #{tpu_custom_call.1} parent=1 // loop_footer_branch
      %17 = sbr.rel target = $region3
    $region8: #{tpu_custom_call.1} parent=1 // loop_exit
      _
    %724 = vsyncpa [#allocation4], 1
    %s725 = scalar_lea.sflag [#allocation4], 1
    %726 = vsyncpa %s725, 1
    %727 = vsyncpa [#allocation7], 1
    %728 = vsyncpa [#allocation5], 1
    %s729 = scalar_lea.sflag [#allocation5], 1
    %730 = vsyncpa %s729, 1

</llo_original>
